<compile_context>
chip_gen: v7x
topology: tpu7x:2x2x1
jax: 0.10.0
libtpu: 0.0.40
codegen_flags: <defaults>
</compile_context>

<pallas_src>
import math
import functools

import jax
import jax.numpy as jnp
from jax.experimental import pallas as pl
from jax.experimental.pallas import tpu as pltpu

GELU_C = math.sqrt(2.0 / math.pi)
_MIB = 1024 * 1024


def _round_up(n, m):
    return (n + m - 1) // m * m


# --------------------------------------------------------------------------------------
# Kernels
# --------------------------------------------------------------------------------------

def _ffn_resident_kernel(x_ref, w1_ref, b1_ref, w2_ref, b2_ref, o_ref):
    # x_ref: (tm, Dp)  w1_ref: (Dp, Hp)  b1_ref: (1, Hp)  w2_ref: (Hp, Dp)  b2_ref: (1, Dp)
    x = x_ref[...]
    h = jnp.dot(x, w1_ref[...], preferred_element_type=jnp.float32)
    h = h + b1_ref[...].astype(jnp.float32)

    # tanh-approx GELU: 0.5*h*(1 + tanh(c*(h + 0.044715*h^3))), math in f32 (VPU/EUP).
    inner = h * (1.0 + 0.044715 * (h * h))
    g = 0.5 * h * (1.0 + jnp.tanh(GELU_C * inner))

    # dropout: module evaluated in inference mode -> identity.
    # TODO(synk): training-mode dropout would use pltpu.prng_seed + pltpu.prng_random_bits.

    out = jnp.dot(g.astype(w2_ref.dtype), w2_ref[...], preferred_element_type=jnp.float32)
    o_ref[...] = (out + b2_ref[...].astype(jnp.float32)).astype(o_ref.dtype)


def _ffn_streamed_kernel(x_ref, w1_ref, b1_ref, w2_ref, b2_ref, o_ref, acc_ref):
    # x_ref: (tm, Dp)  w1_ref: (Dp, th)  b1_ref: (1, th)  w2_ref: (th, Dp)  b2_ref: (1, Dp)
    # o_ref / acc_ref: (tm, Dp).  Grid axis 1 streams H in chunks of th (nk >= 2 guaranteed).
    k = pl.program_id(1)
    nk = pl.num_programs(1)

    x = x_ref[...]
    h = jnp.dot(x, w1_ref[...], preferred_element_type=jnp.float32)
    h = h + b1_ref[...].astype(jnp.float32)

    inner = h * (1.0 + 0.044715 * (h * h))
    g = 0.5 * h * (1.0 + jnp.tanh(GELU_C * inner))

    # dropout: identity (inference mode).

    part = jnp.dot(g.astype(w2_ref.dtype), w2_ref[...], preferred_element_type=jnp.float32)

    @pl.when(k == 0)
    def _():
        # Fold b2 into the first partial; no separate zero-init pass over the accumulator.
        acc_ref[...] = b2_ref[...].astype(jnp.float32) + part

    @pl.when(jnp.logical_and(k > 0, k < nk - 1))
    def _():
        acc_ref[...] += part

    @pl.when(k == nk - 1)
    def _():
        # Fused finalize: read acc once, add last partial, cast, store (saves an acc RMW pass).
        o_ref[...] = (acc_ref[...] + part).astype(o_ref.dtype)


# --------------------------------------------------------------------------------------
# Planning (per-chip VMEM budget and tile selection)
# --------------------------------------------------------------------------------------

def _vmem_capacity_bytes():
    try:
        info = pltpu.get_tpu_info()
        for attr in ("vmem_capacity_bytes", "vmem_bytes", "vmem_size_bytes"):
            cap = getattr(info, attr, None)
            if cap:
                return int(cap)
    except Exception:
        pass
    try:
        kind = jax.devices()[0].device_kind.lower()
        if "v7" in kind:
            return 64 * _MIB
        return 128 * _MIB
    except Exception:
        return 64 * _MIB  # conservative


def _plan_tiles(D, H, x_dtype, w_dtype, out_dtype, budget,
                tm_req=None, th_req=None, mode_req=None):
    Dp = _round_up(D, 128)
    Hp128 = _round_up(H, 128)
    xb = jnp.dtype(x_dtype).itemsize
    wb = jnp.dtype(w_dtype).itemsize
    ob = jnp.dtype(out_dtype).itemsize

    def resident_bytes(tm):
        return (2 * tm * Dp * xb + 2 * tm * Dp * ob            # x, out (double-buffered)
                + 2 * Dp * Hp128 * wb + 2 * Hp128 * Dp * wb    # W1, W2 (counted double-buffered)
                + 2 * Hp128 * wb + 2 * Dp * wb                 # b1, b2
                + 2 * tm * Hp128 * 4)                          # f32 hidden intermediate

    def streamed_bytes(tm, th):
        return (2 * tm * Dp * xb + 2 * tm * Dp * ob + tm * Dp * 4   # x, out, f32 acc
                + 2 * Dp * th * wb + 2 * th * Dp * wb               # W1/W2 chunks (double-buffered)
                + 2 * th * wb + 2 * Dp * wb                         # b1 chunk, b2
                + 2 * tm * th * 4)                                  # f32 hidden intermediate

    tm_cands = [1024, 768, 512, 384, 256, 128, 64, 32, 16, 8]
    if tm_req is not None:
        tm_cands = [max(_round_up(int(tm_req), 8), 8)]
    th_cands = [t for t in (2048, 1024, 512, 256, 128) if t <= Hp128] or [128]
    if th_req is not None:
        th_cands = [max(_round_up(int(th_req), 128), 128)]

    plan = None
    if mode_req in (None, "resident"):
        for tm in tm_cands:
            if resident_bytes(tm) <= budget:
                plan = {"mode": "resident", "tm": tm, "th": Hp128, "Dp": Dp, "Hp": Hp128}
                break
        if plan is None and mode_req == "resident":
            plan = {"mode": "resident", "tm": tm_cands[-1], "th": Hp128, "Dp": Dp, "Hp": Hp128}

    if plan is None:
        for tm in tm_cands:
            for th in th_cands:
                if streamed_bytes(tm, th) <= budget:
                    plan = {"mode": "streamed", "tm": tm, "th": th, "Dp": Dp,
                            "Hp": _round_up(H, th)}
                    break
            if plan is not None:
                break
    if plan is None:  # fall back to smallest tiles even if the estimate is over budget
        th = th_cands[-1]
        plan = {"mode": "streamed", "tm": tm_cands[-1], "th": th, "Dp": Dp,
                "Hp": _round_up(H, th)}

    # A single H chunk in streamed mode degenerates to the resident path.
    if plan["mode"] == "streamed" and plan["Hp"] // plan["th"] < 2:
        plan = {"mode": "resident", "tm": plan["tm"], "th": Hp128, "Dp": Dp, "Hp": Hp128}
    return plan


# --------------------------------------------------------------------------------------
# Jitted forward (parameters are pre-padded; only x is padded per call)
# --------------------------------------------------------------------------------------

@functools.partial(jax.jit, static_argnames=("mode", "tm_max", "th", "vmem_limit"))
def _ffn_forward(x, w1, b1, w2, b2, *, mode, tm_max, th, vmem_limit):
    orig_shape = x.shape
    D = orig_shape[-1]
    Dp, Hp = w1.shape
    x2d = x.reshape(-1, D)
    M = x2d.shape[0]
    M8 = max(_round_up(M, 8), 8)

    tm = min(tm_max, M8)
    # Megacore (v7x): if everything fits in one row tile but M is big enough, split into 2 tiles
    # so the "parallel" axis shards across both TensorCores.
    if tm >= M8 and M8 >= 512:
        tm = _round_up((M8 + 1) // 2, 8)
    M_pad = _round_up(M, tm)

    xp = x2d
    if M_pad != M or Dp != D:
        xp = jnp.pad(x2d, ((0, M_pad - M), (0, Dp - D)))

    if mode == "resident":
        out = pl.pallas_call(
            _ffn_resident_kernel,
            out_shape=jax.ShapeDtypeStruct((M_pad, Dp), x.dtype),
            grid_spec=pltpu.PrefetchScalarGridSpec(
                num_scalar_prefetch=0,
                grid=(M_pad // tm,),
                in_specs=[
                    pl.BlockSpec((tm, Dp), lambda i: (i, 0)),   # x row tile
                    pl.BlockSpec((Dp, Hp), lambda i: (0, 0)),   # W1 (resident)
                    pl.BlockSpec((1, Hp), lambda i: (0, 0)),    # b1
                    pl.BlockSpec((Hp, Dp), lambda i: (0, 0)),   # W2 (resident)
                    pl.BlockSpec((1, Dp), lambda i: (0, 0)),    # b2
                ],
                out_specs=pl.BlockSpec((tm, Dp), lambda i: (i, 0)),
            ),
            compiler_params=pltpu.CompilerParams(
                dimension_semantics=("parallel",),
                vmem_limit_bytes=vmem_limit,
            ),
        )(xp, w1, b1, w2, b2)
    else:
        nk = Hp // th
        assert nk >= 2, "streamed mode requires at least 2 H chunks"
        out = pl.pallas_call(
            _ffn_streamed_kernel,
            out_shape=jax.ShapeDtypeStruct((M_pad, Dp), x.dtype),
            grid_spec=pltpu.PrefetchScalarGridSpec(
                num_scalar_prefetch=0,
                grid=(M_pad // tm, nk),
                in_specs=[
                    pl.BlockSpec((tm, Dp), lambda i, k: (i, 0)),   # x row tile
                    pl.BlockSpec((Dp, th), lambda i, k: (0, k)),   # W1 H-chunk
                    pl.BlockSpec((1, th), lambda i, k: (0, k)),    # b1 chunk
                    pl.BlockSpec((th, Dp), lambda i, k: (k, 0)),   # W2 H-chunk
                    pl.BlockSpec((1, Dp), lambda i, k: (0, 0)),    # b2
                ],
                out_specs=pl.BlockSpec((tm, Dp), lambda i, k: (i, 0)),
                scratch_shapes=[pltpu.VMEM((tm, Dp), jnp.float32)],
            ),
            compiler_params=pltpu.CompilerParams(
                dimension_semantics=("parallel", "arbitrary"),
                vmem_limit_bytes=vmem_limit,
            ),
        )(xp, w1, b1, w2, b2)

    return out[:M, :D].reshape(orig_shape)


# --------------------------------------------------------------------------------------
# Module wrapper (mirrors the PyTorch FeedForward forward pass)
# --------------------------------------------------------------------------------------

class FeedForwardPallas:
    """Linear -> tanh-GELU -> Dropout(eval: identity) -> Linear.

    Takes PyTorch-layout parameters: layer{1,2}_weight are (out_features, in_features),
    layer{1,2}_bias are (out_features,).  Transpose + lane-dense padding happen once here,
    outside the per-call jitted path.
    """

    def __init__(self, layer1_weight, layer1_bias, layer2_weight, layer2_bias,
                 *, tm=None, th=None, mode=None, param_dtype=None):
        w1 = jnp.asarray(layer1_weight).T   # (D, H)
        b1 = jnp.asarray(layer1_bias)
        w2 = jnp.asarray(layer2_weight).T   # (H, D)
        b2 = jnp.asarray(layer2_bias)
        if param_dtype is not None:         # e.g. jnp.bfloat16 for full MXU rate / half weight BW
            w1 = w1.astype(param_dtype)
            w2 = w2.astype(param_dtype)
        D, H = w1.shape

        cap = _vmem_capacity_bytes()
        self._vmem_limit = int(min(int(cap * 0.80), 100 * _MIB))
        budget = self._vmem_limit - 6 * _MIB
        self._plan = _plan_tiles(D, H, w1.dtype, w1.dtype, w1.dtype, budget,
                                 tm_req=tm, th_req=th, mode_req=mode)
        Dp, Hp = self._plan["Dp"], self._plan["Hp"]

        # One-time parameter padding (hoisted out of the jitted per-call path).
        self._w1 = jnp.pad(w1, ((0, Dp - D), (0, Hp - H))) if (Dp != D or Hp != H) else w1
        self._b1 = jnp.pad(b1, (0, Hp - H)).reshape(1, Hp)
        self._w2 = jnp.pad(w2, ((0, Hp - H), (0, Dp - D))) if (Dp != D or Hp != H) else w2
        self._b2 = jnp.pad(b2, (0, Dp - D)).reshape(1, Dp)

    def __call__(self, x):
        return _ffn_forward(x, self._w1, self._b1, self._w2, self._b2,
                            mode=self._plan["mode"], tm_max=self._plan["tm"],
                            th=self._plan["th"], vmem_limit=self._vmem_limit)


def _reference(x, w1_t, b1, w2_t, b2):
    # PyTorch layout reference: w1_t (H, D), w2_t (D, H).
    h = x @ w1_t.T + b1
    g = 0.5 * h * (1.0 + jnp.tanh(GELU_C * (h + 0.044715 * h ** 3)))
    return g @ w2_t.T + b2


if __name__ == "__main__":
    # Module config: FeedForward(in_features=32, middle_features=64, dropout=0.1); batch=2, seq=8.
    in_features, middle_features = 32, 64
    batch, seq = 2, 8

    key = jax.random.PRNGKey(0)
    kx, kw1, kb1, kw2, kb2 = jax.random.split(key, 5)

    x = jax.random.normal(kx, (batch, seq, in_features), dtype=jnp.float32)

    # PyTorch-layout params mirroring _init_weights: weights ~ N(0, 0.02), nn.Linear-style biases.
    w1_t = 0.02 * jax.random.normal(kw1, (middle_features, in_features), dtype=jnp.float32)
    w2_t = 0.02 * jax.random.normal(kw2, (in_features, middle_features), dtype=jnp.float32)
    b1 = jax.random.uniform(kb1, (middle_features,), dtype=jnp.float32,
                            minval=-1.0 / math.sqrt(in_features),
                            maxval=1.0 / math.sqrt(in_features))
    b2 = jax.random.uniform(kb2, (in_features,), dtype=jnp.float32,
                            minval=-1.0 / math.sqrt(middle_features),
                            maxval=1.0 / math.sqrt(middle_features))

    # Test 1: auto plan (weights-resident fast path at these sizes).
    ffn = FeedForwardPallas(w1_t, b1, w2_t, b2)
    out = jax.block_until_ready(ffn(x))
    ref = _reference(x, w1_t, b1, w2_t, b2)
    assert out.shape == x.shape
    assert jnp.allclose(out, ref, atol=1e-4, rtol=1e-4), "mismatch (resident path, small shapes)"

    # Test 2: force the streamed/accumulator path with padding + multi-chunk H and multi-row grid.
    D2, H2, M2 = 96, 272, 300
    k2 = jax.random.split(key, 4)
    x2 = jax.random.normal(k2[0], (M2, D2), dtype=jnp.float32)
    w1b_t = 0.02 * jax.random.normal(k2[1], (H2, D2), dtype=jnp.float32)
    w2b_t = 0.02 * jax.random.normal(k2[2], (D2, H2), dtype=jnp.float32)
    b1b = jax.random.uniform(k2[3], (H2,), dtype=jnp.float32, minval=-0.1, maxval=0.1)
    b2b = jnp.zeros((D2,), dtype=jnp.float32)

    ffn_s = FeedForwardPallas(w1b_t, b1b, w2b_t, b2b, mode="streamed", tm=128, th=128)
    out2 = jax.block_until_ready(ffn_s(x2))
    ref2 = _reference(x2, w1b_t, b1b, w2b_t, b2b)
    assert jnp.allclose(out2, ref2, atol=1e-4, rtol=1e-4), "mismatch (streamed path, padded shapes)"

    # Test 3: same non-divisible shapes through the auto (resident) plan to exercise padding there.
    ffn_r = FeedForwardPallas(w1b_t, b1b, w2b_t, b2b)
    out3 = jax.block_until_ready(ffn_r(x2))
    assert jnp.allclose(out3, ref2, atol=1e-4, rtol=1e-4), "mismatch (resident path, padded shapes)"

    print("KERNEL_OK")
</pallas_src>

<mosaic_0001>
module attributes {stable_mosaic.version = 11 : i64} {
  func.func @_ffn_resident_kernel(%arg0: i32, %arg1: memref<16x128xf32, #tpu.memory_space<vmem>>, %arg2: memref<128x128xf32, #tpu.memory_space<vmem>>, %arg3: memref<1x128xf32, #tpu.memory_space<vmem>>, %arg4: memref<128x128xf32, #tpu.memory_space<vmem>>, %arg5: memref<1x128xf32, #tpu.memory_space<vmem>>, %arg6: memref<16x128xf32, #tpu.memory_space<vmem>>) attributes {dimension_semantics = [#tpu.dimension_semantics<parallel>], iteration_bounds = array<i64: 1>, scalar_prefetch = 0 : i64, scratch_operands = 0 : i64, tpu.core_type = #tpu.core_type<tc>, window_params = [{transform_indices = @transform_0, window_bounds = array<i64: 16, 128>}, {pipeline_mode = #tpu.pipeline_mode<synchronous>, transform_indices = @transform_1, window_bounds = array<i64: 128, 128>}, {pipeline_mode = #tpu.pipeline_mode<synchronous>, transform_indices = @transform_2, window_bounds = array<i64: 1, 128>}, {pipeline_mode = #tpu.pipeline_mode<synchronous>, transform_indices = @transform_3, window_bounds = array<i64: 128, 128>}, {pipeline_mode = #tpu.pipeline_mode<synchronous>, transform_indices = @transform_4, window_bounds = array<i64: 1, 128>}, {transform_indices = @transform_5, window_bounds = array<i64: 16, 128>}]} {
    %c0 = arith.constant 0 : index
    %c0_0 = arith.constant 0 : index
    %0 = vector.load %arg1[%c0, %c0_0] : memref<16x128xf32, #tpu.memory_space<vmem>>, vector<16x128xf32>
    %c0_1 = arith.constant 0 : index
    %c0_2 = arith.constant 0 : index
    %1 = vector.load %arg2[%c0_1, %c0_2] : memref<128x128xf32, #tpu.memory_space<vmem>>, vector<128x128xf32>
    %cst = arith.constant dense<0.000000e+00> : vector<16x128xf32>
    %2 = tpu.matmul %0, %1, %cst {dimension_numbers = #tpu.dot_dimension_numbers<[1], [0], [0], [1], [0, 0, 1, 1], [], []>} : vector<16x128xf32>, vector<128x128xf32>, vector<16x128xf32> -> vector<16x128xf32>
    %c0_3 = arith.constant 0 : index
    %c0_4 = arith.constant 0 : index
    %3 = vector.load %arg3[%c0_3, %c0_4] : memref<1x128xf32, #tpu.memory_space<vmem>>, vector<1x128xf32>
    %4 = vector.broadcast %3 : vector<1x128xf32> to vector<16x128xf32>
    %5 = arith.addf %2, %4 : vector<16x128xf32>
    %6 = arith.mulf %5, %5 : vector<16x128xf32>
    %cst_5 = arith.constant 4.471500e-02 : f32
    %7 = vector.broadcast %cst_5 : f32 to vector<16x128xf32>
    %8 = arith.mulf %7, %6 : vector<16x128xf32>
    %cst_6 = arith.constant 1.000000e+00 : f32
    %9 = vector.broadcast %cst_6 : f32 to vector<16x128xf32>
    %10 = arith.addf %9, %8 : vector<16x128xf32>
    %11 = arith.mulf %5, %10 : vector<16x128xf32>
    %cst_7 = arith.constant 5.000000e-01 : f32
    %12 = vector.broadcast %cst_7 : f32 to vector<16x128xf32>
    %13 = arith.mulf %12, %5 : vector<16x128xf32>
    %cst_8 = arith.constant 0.797884583 : f32
    %14 = vector.broadcast %cst_8 : f32 to vector<16x128xf32>
    %15 = arith.mulf %14, %11 : vector<16x128xf32>
    %16 = math.tanh %15 : vector<16x128xf32>
    %cst_9 = arith.constant 1.000000e+00 : f32
    %17 = vector.broadcast %cst_9 : f32 to vector<16x128xf32>
    %18 = arith.addf %17, %16 : vector<16x128xf32>
    %19 = arith.mulf %13, %18 : vector<16x128xf32>
    %c0_10 = arith.constant 0 : index
    %c0_11 = arith.constant 0 : index
    %20 = vector.load %arg4[%c0_10, %c0_11] : memref<128x128xf32, #tpu.memory_space<vmem>>, vector<128x128xf32>
    %cst_12 = arith.constant dense<0.000000e+00> : vector<16x128xf32>
    %21 = tpu.matmul %19, %20, %cst_12 {dimension_numbers = #tpu.dot_dimension_numbers<[1], [0], [0], [1], [0, 0, 1, 1], [], []>} : vector<16x128xf32>, vector<128x128xf32>, vector<16x128xf32> -> vector<16x128xf32>
    %c0_13 = arith.constant 0 : index
    %c0_14 = arith.constant 0 : index
    %22 = vector.load %arg5[%c0_13, %c0_14] : memref<1x128xf32, #tpu.memory_space<vmem>>, vector<1x128xf32>
    %23 = vector.broadcast %22 : vector<1x128xf32> to vector<16x128xf32>
    %24 = arith.addf %21, %23 : vector<16x128xf32>
    %c0_15 = arith.constant 0 : index
    %c0_16 = arith.constant 0 : index
    %25 = vector.load %arg6[%c0_15, %c0_16] : memref<16x128xf32, #tpu.memory_space<vmem>>, vector<16x128xf32>
    tpu.vector_store %arg6[%c0_15, %c0_16], %24 {strides = array<i32>} : memref<16x128xf32, #tpu.memory_space<vmem>>, vector<16x128xf32>,
    return
  }
  func.func @transform_0(%arg0: i32) -> (i32, i32) {
    %c0_i32 = arith.constant 0 : i32
    %c0_i32_0 = arith.constant 0 : i32
    return %arg0, %c0_i32 : i32, i32
  }
  func.func @transform_1(%arg0: i32) -> (i32, i32) {
    %c0_i32 = arith.constant 0 : i32
    %c0_i32_0 = arith.constant 0 : i32
    %c0_i32_1 = arith.constant 0 : i32
    return %c0_i32, %c0_i32_0 : i32, i32
  }
  func.func @transform_2(%arg0: i32) -> (i32, i32) {
    %c0_i32 = arith.constant 0 : i32
    %c0_i32_0 = arith.constant 0 : i32
    %c0_i32_1 = arith.constant 0 : i32
    return %c0_i32, %c0_i32_0 : i32, i32
  }
  func.func @transform_3(%arg0: i32) -> (i32, i32) {
    %c0_i32 = arith.constant 0 : i32
    %c0_i32_0 = arith.constant 0 : i32
    %c0_i32_1 = arith.constant 0 : i32
    return %c0_i32, %c0_i32_0 : i32, i32
  }
  func.func @transform_4(%arg0: i32) -> (i32, i32) {
    %c0_i32 = arith.constant 0 : i32
    %c0_i32_0 = arith.constant 0 : i32
    %c0_i32_1 = arith.constant 0 : i32
    return %c0_i32, %c0_i32_0 : i32, i32
  }
  func.func @transform_5(%arg0: i32) -> (i32, i32) {
    %c0_i32 = arith.constant 0 : i32
    %c0_i32_0 = arith.constant 0 : i32
    return %arg0, %c0_i32 : i32, i32
  }
}

</mosaic_0001>

<llo_original>
// kernel: _ffn_forward.1
$region0: #{_ffn_forward.1}
  #allocation0 [shape = 'u32[]', space=smem, size = 0x4, offset = 0x4, fixed_abs, tag = 'smem constant byte address 0x4 - core index']
  #allocation1 [shape = 'u32[144,128]{1,0:T(1,128)}', space=vmem, size = 0x12000, scoped, tag = 'internal scratch']
  %s0 = inlined_call_operand.hbm [shape: f32[16,128], index: 0, kind: input, shape index: {}]
  %s1 = inlined_call_operand.hbm [shape: f32[128,128], index: 1, kind: input, shape index: {}]
  %s2 = inlined_call_operand.hbm [shape: f32[1,128], index: 2, kind: input, shape index: {}]
  %s3 = inlined_call_operand.hbm [shape: f32[128,128], index: 3, kind: input, shape index: {}]
  %s4 = inlined_call_operand.hbm [shape: f32[1,128], index: 4, kind: input, shape index: {}]
  %s5 = inlined_call_operand.hbm [shape: f32[16,128], index: 5, kind: output, shape index: {}]
  %s6 = sld [smem:[#allocation0]]
  $region50: #{_ffn_forward.1} parent=0
    _
  %s8 = ssub.s32 1, %s6
  %s9 = scalar_select 0, %s8, %s6
  $region1: #{_ffn_forward.1} parent=0
    #allocation2 [shape = 'u8[8192]{0}', space=vmem, size = 0x2000, scoped, tag = 'input window, operand 0, single buffered']
    #allocation3 [shape = 's32[1]{0}', space=sflag, size = 0x4, scoped, tag = 'scoped memory for _ffn_forward.1']
    #allocation4 [shape = 's32[1]{0}', space=sflag, size = 0x4, scoped, tag = 'scoped memory for _ffn_forward.1']
    #allocation5 [shape = 'u8[65536]{0}', space=vmem, size = 0x10000, scoped, tag = 'input window, operand 1, single buffered']
    #allocation6 [shape = 's32[1]{0}', space=sflag, size = 0x4, scoped, tag = 'scoped memory for _ffn_forward.1']
    #allocation7 [shape = 'u8[512]{0}', space=vmem, size = 0x400, scoped, tag = 'input window, operand 2, single buffered']
    #allocation8 [shape = 'u8[65536]{0}', space=vmem, size = 0x10000, scoped, tag = 'input window, operand 3, single buffered']
    #allocation9 [shape = 's32[1]{0}', space=sflag, size = 0x4, scoped, tag = 'scoped memory for _ffn_forward.1']
    #allocation10 [shape = 'u8[512]{0}', space=vmem, size = 0x400, scoped, tag = 'input window, operand 4, single buffered']
    #allocation11 [shape = 'u8[8192]{0}', space=vmem, size = 0x2000, scoped, tag = 'output window, operand 0, single buffered']
    %10 = vsyncpa [#allocation3], 0
    %11 = vsyncpa [#allocation6], 0
    %12 = vsyncpa [#allocation9], 0
    %13 = vsyncpa [#allocation4], 0
    // Predicated region
    $region2: #{_ffn_forward.1} parent=1 // pred_check
      _
    $region3: #{_ffn_forward.1} parent=1 // pred_check_branch
      %15 = sbr.rel (0) target = $region5
    $region4: #{_ffn_forward.1} parent=1 // pred_region
      %s17 = ssub.s32 256, 256
      %18 = vsyncadd [#allocation3], %s17
      %s19 = sshll.u32 [#allocation2], 4
      %s20 = int_to_ptr.vmem [resolvable:$true] %s19
      %25 = dma.hbm_to_vmem [thread:$0]  %s0, 256, %s20, [#allocation3], 128, 128, 8
    $region5: #{_ffn_forward.1} parent=1 // pred_fallthru
      _
    // Predicated region
    $region6: #{_ffn_forward.1} parent=1 // pred_check
      _
    $region7: #{_ffn_forward.1} parent=1 // pred_check_branch
      %27 = sbr.rel (0) target = $region9
    $region8: #{_ffn_forward.1} parent=1 // pred_region
      %s29 = ssub.s32 2048, 2048
      %30 = vsyncadd [#allocation6], %s29
      %s31 = sshll.u32 [#allocation5], 4
      %s32 = int_to_ptr.vmem [resolvable:$true] %s31
      %37 = dma.hbm_to_vmem [thread:$0]  %s1, 2048, %s32, [#allocation6], 128, 128, 8
    $region9: #{_ffn_forward.1} parent=1 // pred_fallthru
      _
    // Predicated region
    $region10: #{_ffn_forward.1} parent=1 // pred_check
      _
    $region11: #{_ffn_forward.1} parent=1 // pred_check_branch
      %39 = sbr.rel (0) target = $region13
    $region12: #{_ffn_forward.1} parent=1 // pred_region
      %s41 = ssub.s32 16, 16
      %42 = vsyncadd [#allocation6], %s41
      %s44 = sshll.u32 [#allocation7], 4
      %s45 = int_to_ptr.vmem [resolvable:$true] %s44
      %47 = dma.hbm_to_vmem [thread:$0]  %s2, 16, %s45, [#allocation6]
    $region13: #{_ffn_forward.1} parent=1 // pred_fallthru
      _
    // Predicated region
    $region14: #{_ffn_forward.1} parent=1 // pred_check
      _
    $region15: #{_ffn_forward.1} parent=1 // pred_check_branch
      %49 = sbr.rel (0) target = $region17
    $region16: #{_ffn_forward.1} parent=1 // pred_region
      %s51 = ssub.s32 2048, 2048
      %52 = vsyncadd [#allocation9], %s51
      %s53 = sshll.u32 [#allocation8], 4
      %s54 = int_to_ptr.vmem [resolvable:$true] %s53
      %59 = dma.hbm_to_vmem [thread:$0]  %s3, 2048, %s54, [#allocation9], 128, 128, 8
    $region17: #{_ffn_forward.1} parent=1 // pred_fallthru
      _
    // Predicated region
    $region18: #{_ffn_forward.1} parent=1 // pred_check
      _
    $region19: #{_ffn_forward.1} parent=1 // pred_check_branch
      %61 = sbr.rel (0) target = $region21
    $region20: #{_ffn_forward.1} parent=1 // pred_region
      %s63 = ssub.s32 16, 16
      %64 = vsyncadd [#allocation9], %s63
      %s66 = sshll.u32 [#allocation10], 4
      %s67 = int_to_ptr.vmem [resolvable:$true] %s66
      %69 = dma.hbm_to_vmem [thread:$0]  %s4, 16, %s67, [#allocation9]
    $region21: #{_ffn_forward.1} parent=1 // pred_fallthru
      _
    // Predicated region
    $region22: #{_ffn_forward.1} parent=1 // pred_check
      _
    $region23: #{_ffn_forward.1} parent=1 // pred_check_branch
      %71 = sbr.rel (0) target = $region25
    $region24: #{_ffn_forward.1} parent=1 // pred_region
      %72 = dma.done [#allocation3], 256
    $region25: #{_ffn_forward.1} parent=1 // pred_fallthru
      _
    // Predicated region
    $region26: #{_ffn_forward.1} parent=1 // pred_check
      _
    $region27: #{_ffn_forward.1} parent=1 // pred_check_branch
      %74 = sbr.rel (0) target = $region29
    $region28: #{_ffn_forward.1} parent=1 // pred_region
      %75 = dma.done [#allocation6], 2048
    $region29: #{_ffn_forward.1} parent=1 // pred_fallthru
      _
    // Predicated region
    $region30: #{_ffn_forward.1} parent=1 // pred_check
      _
    $region31: #{_ffn_forward.1} parent=1 // pred_check_branch
      %77 = sbr.rel (0) target = $region33
    $region32: #{_ffn_forward.1} parent=1 // pred_region
      %78 = dma.done [#allocation6], 16
    $region33: #{_ffn_forward.1} parent=1 // pred_fallthru
      _
    // Predicated region
    $region34: #{_ffn_forward.1} parent=1 // pred_check
      _
    $region35: #{_ffn_forward.1} parent=1 // pred_check_branch
      %80 = sbr.rel (0) target = $region37
    $region36: #{_ffn_forward.1} parent=1 // pred_region
      %81 = dma.done [#allocation9], 2048
    $region37: #{_ffn_forward.1} parent=1 // pred_fallthru
      _
    // Predicated region
    $region38: #{_ffn_forward.1} parent=1 // pred_check
      _
    $region39: #{_ffn_forward.1} parent=1 // pred_check_branch
      %83 = sbr.rel (0) target = $region41
    $region40: #{_ffn_forward.1} parent=1 // pred_region
      %84 = dma.done [#allocation9], 16
    $region41: #{_ffn_forward.1} parent=1 // pred_fallthru
      _
    %v85 = vld [vmem:[#allocation2] sm:$0xff]
    %v86 = vld [vmem:[#allocation2 + $0x8] sm:$0xff]
    %v87 = vld [vmem:[#allocation5] sm:$0xff]
    %v88 = vld [vmem:[#allocation5 + $0x8] sm:$0xff]
    %v89 = vld [vmem:[#allocation5 + $0x10] sm:$0xff]
    %v90 = vld [vmem:[#allocation5 + $0x18] sm:$0xff]
    %v91 = vld [vmem:[#allocation5 + $0x20] sm:$0xff]
    %v92 = vld [vmem:[#allocation5 + $0x28] sm:$0xff]
    %v93 = vld [vmem:[#allocation5 + $0x30] sm:$0xff]
    %v94 = vld [vmem:[#allocation5 + $0x38] sm:$0xff]
    %v95 = vld [vmem:[#allocation5 + $0x40] sm:$0xff]
    %v96 = vld [vmem:[#allocation5 + $0x48] sm:$0xff]
    %v97 = vld [vmem:[#allocation5 + $0x50] sm:$0xff]
    %v98 = vld [vmem:[#allocation5 + $0x58] sm:$0xff]
    %v99 = vld [vmem:[#allocation5 + $0x60] sm:$0xff]
    %v100 = vld [vmem:[#allocation5 + $0x68] sm:$0xff]
    %v101 = vld [vmem:[#allocation5 + $0x70] sm:$0xff]
    %v102 = vld [vmem:[#allocation5 + $0x78] sm:$0xff]
    %v103 = vld [vmem:[#allocation7] sm:$0x1]
    %v105 = vlaneseq
    %v106 = vshrl.u32 %v105, 7
    %v107 = vsub.s32 0, %v106
    %v108 = vrot.slane %v103, %v107
    %110 = vmatprep.subr.mxu0 0.0
    %111 = vmatpush1.msra.mxu0 %v87
    %112 = vmatprep.subr.mxu0 0.0
    %113 = vmatpush1.msra.mxu0 %v88
    %114 = vmatprep.subr.mxu0 0.0
    %115 = vmatpush1.msra.mxu0 %v89
    %116 = vmatprep.subr.mxu0 0.0
    %117 = vmatpush1.msra.mxu0 %v90
    %118 = vmatprep.subr.mxu0 0.0
    %119 = vmatpush1.msra.mxu0 %v91
    %120 = vmatprep.subr.mxu0 0.0
    %121 = vmatpush1.msra.mxu0 %v92
    %122 = vmatprep.subr.mxu0 0.0
    %123 = vmatpush1.msra.mxu0 %v93
    %124 = vmatprep.subr.mxu0 0.0
    %125 = vmatpush1.msra.mxu0 %v94
    %126 = vmatprep.subr.mxu0 0.0
    %127 = vmatpush1.msra.mxu0 %v95
    %128 = vmatprep.subr.mxu0 0.0
    %129 = vmatpush1.msra.mxu0 %v96
    %130 = vmatprep.subr.mxu0 0.0
    %131 = vmatpush1.msra.mxu0 %v97
    %132 = vmatprep.subr.mxu0 0.0
    %133 = vmatpush1.msra.mxu0 %v98
    %134 = vmatprep.subr.mxu0 0.0
    %135 = vmatpush1.msra.mxu0 %v99
    %136 = vmatprep.subr.mxu0 0.0
    %137 = vmatpush1.msra.mxu0 %v100
    %138 = vmatprep.subr.mxu0 0.0
    %139 = vmatpush1.msra.mxu0 %v101
    %140 = vmatprep.subr.mxu0 0.0
    %141 = vmatpush1.msra.mxu0 %v102
    %142 = vmatprep.subr.mxu0 0.0
    %143 = vmatpush1.msra.mxu0 0.0
    %144 = vmatprep.subr.mxu0 0.0
    %145 = vmatpush1.msra.mxu0 0.0
    %146 = vmatprep.subr.mxu0 0.0
    %147 = vmatpush1.msra.mxu0 0.0
    %148 = vmatprep.subr.mxu0 0.0
    %149 = vmatpush1.msra.mxu0 0.0
    %150 = vmatprep.subr.mxu0 0.0
    %151 = vmatpush1.msra.mxu0 0.0
    %152 = vmatprep.subr.mxu0 0.0
    %153 = vmatpush1.msra.mxu0 0.0
    %154 = vmatprep.subr.mxu0 0.0
    %155 = vmatpush1.msra.mxu0 0.0
    %156 = vmatprep.subr.mxu0 0.0
    %157 = vmatpush1.msra.mxu0 0.0
    %158 = vmatprep.subr.mxu0 0.0
    %159 = vmatpush1.msra.mxu0 0.0
    %160 = vmatprep.subr.mxu0 0.0
    %161 = vmatpush1.msra.mxu0 0.0
    %162 = vmatprep.subr.mxu0 0.0
    %163 = vmatpush1.msra.mxu0 0.0
    %164 = vmatprep.subr.mxu0 0.0
    %165 = vmatpush1.msra.mxu0 0.0
    %166 = vmatprep.subr.mxu0 0.0
    %167 = vmatpush1.msra.mxu0 0.0
    %168 = vmatprep.subr.mxu0 0.0
    %169 = vmatpush1.msra.mxu0 0.0
    %170 = vmatprep.subr.mxu0 0.0
    %171 = vmatpush1.msra.mxu0 0.0
    %172 = vmatprep.subr.mxu0 0.0
    %173 = vmatpush1.msra.mxu0 0.0
    %174 = vmatprep.mubr.f32.mxu0 0.0
    %175 = vmatmul.mubr.f32.gmra.mrb[0].mxu0 %v85
    %v176 = vpop.f32.mrb[0].mxu0
    %v177 = vadd.f32 %v108, %v176
    %v178 = vpop.f32.mrb[0].mxu0
    %179 = vmatprep.mubr.f32.mxu0 0.0
    %180 = vmatmul.mubr.f32.gmra.mrb[0].mxu0 %v86
    %v181 = vpop.f32.mrb[0].mxu0
    %v182 = vadd.f32 %v108, %v181
    %v183 = vpop.f32.mrb[0].mxu0
    %184 = vdwg.mxu0
    %v185 = vmul.f32 %v177, %v177
    %v186 = vmul.f32 %v182, %v182
    %v187 = vmul.f32 %v185, 0.044715
    %v188 = vmul.f32 %v186, 0.044715
    %v189 = vadd.f32 %v187, 1.0
    %v190 = vadd.f32 %v188, 1.0
    %v191 = vmul.f32 %v177, %v189
    %v192 = vmul.f32 %v182, %v190
    %v193 = vmul.f32 %v177, 0.5
    %v194 = vmul.f32 %v182, 0.5
    %v195 = vmul.f32 %v191, 0.7978846
    %v196 = vmul.f32 %v192, 0.7978846
    %v197 = vtanh.pop %v195
    %v198 = vtanh.pop %v196
    %v199 = vadd.f32 %v197, 1.0
    %v200 = vadd.f32 %v198, 1.0
    %v201 = vmul.f32 %v193, %v199
    %v202 = vmul.f32 %v194, %v200
    %v203 = vld [vmem:[#allocation8] sm:$0xff]
    %v204 = vld [vmem:[#allocation8 + $0x8] sm:$0xff]
    %v205 = vld [vmem:[#allocation8 + $0x10] sm:$0xff]
    %v206 = vld [vmem:[#allocation8 + $0x18] sm:$0xff]
    %v207 = vld [vmem:[#allocation8 + $0x20] sm:$0xff]
    %v208 = vld [vmem:[#allocation8 + $0x28] sm:$0xff]
    %v209 = vld [vmem:[#allocation8 + $0x30] sm:$0xff]
    %v210 = vld [vmem:[#allocation8 + $0x38] sm:$0xff]
    %v211 = vld [vmem:[#allocation8 + $0x40] sm:$0xff]
    %v212 = vld [vmem:[#allocation8 + $0x48] sm:$0xff]
    %v213 = vld [vmem:[#allocation8 + $0x50] sm:$0xff]
    %v214 = vld [vmem:[#allocation8 + $0x58] sm:$0xff]
    %v215 = vld [vmem:[#allocation8 + $0x60] sm:$0xff]
    %v216 = vld [vmem:[#allocation8 + $0x68] sm:$0xff]
    %v217 = vld [vmem:[#allocation8 + $0x70] sm:$0xff]
    %v218 = vld [vmem:[#allocation8 + $0x78] sm:$0xff]
    %v219 = vld [vmem:[#allocation10] sm:$0x1]
    %v221 = vlaneseq
    %v222 = vshrl.u32 %v221, 7
    %v223 = vsub.s32 0, %v222
    %v224 = vrot.slane %v219, %v223
    %226 = vmatprep.subr.mxu0 0.0
    %227 = vmatpush1.msra.mxu0 %v203
    %228 = vmatprep.subr.mxu0 0.0
    %229 = vmatpush1.msra.mxu0 %v204
    %230 = vmatprep.subr.mxu0 0.0
    %231 = vmatpush1.msra.mxu0 %v205
    %232 = vmatprep.subr.mxu0 0.0
    %233 = vmatpush1.msra.mxu0 %v206
    %234 = vmatprep.subr.mxu0 0.0
    %235 = vmatpush1.msra.mxu0 %v207
    %236 = vmatprep.subr.mxu0 0.0
    %237 = vmatpush1.msra.mxu0 %v208
    %238 = vmatprep.subr.mxu0 0.0
    %239 = vmatpush1.msra.mxu0 %v209
    %240 = vmatprep.subr.mxu0 0.0
    %241 = vmatpush1.msra.mxu0 %v210
    %242 = vmatprep.subr.mxu0 0.0
    %243 = vmatpush1.msra.mxu0 %v211
    %244 = vmatprep.subr.mxu0 0.0
    %245 = vmatpush1.msra.mxu0 %v212
    %246 = vmatprep.subr.mxu0 0.0
    %247 = vmatpush1.msra.mxu0 %v213
    %248 = vmatprep.subr.mxu0 0.0
    %249 = vmatpush1.msra.mxu0 %v214
    %250 = vmatprep.subr.mxu0 0.0
    %251 = vmatpush1.msra.mxu0 %v215
    %252 = vmatprep.subr.mxu0 0.0
    %253 = vmatpush1.msra.mxu0 %v216
    %254 = vmatprep.subr.mxu0 0.0
    %255 = vmatpush1.msra.mxu0 %v217
    %256 = vmatprep.subr.mxu0 0.0
    %257 = vmatpush1.msra.mxu0 %v218
    %258 = vmatprep.subr.mxu0 0.0
    %259 = vmatpush1.msra.mxu0 0.0
    %260 = vmatprep.subr.mxu0 0.0
    %261 = vmatpush1.msra.mxu0 0.0
    %262 = vmatprep.subr.mxu0 0.0
    %263 = vmatpush1.msra.mxu0 0.0
    %264 = vmatprep.subr.mxu0 0.0
    %265 = vmatpush1.msra.mxu0 0.0
    %266 = vmatprep.subr.mxu0 0.0
    %267 = vmatpush1.msra.mxu0 0.0
    %268 = vmatprep.subr.mxu0 0.0
    %269 = vmatpush1.msra.mxu0 0.0
    %270 = vmatprep.subr.mxu0 0.0
    %271 = vmatpush1.msra.mxu0 0.0
    %272 = vmatprep.subr.mxu0 0.0
    %273 = vmatpush1.msra.mxu0 0.0
    %274 = vmatprep.subr.mxu0 0.0
    %275 = vmatpush1.msra.mxu0 0.0
    %276 = vmatprep.subr.mxu0 0.0
    %277 = vmatpush1.msra.mxu0 0.0
    %278 = vmatprep.subr.mxu0 0.0
    %279 = vmatpush1.msra.mxu0 0.0
    %280 = vmatprep.subr.mxu0 0.0
    %281 = vmatpush1.msra.mxu0 0.0
    %282 = vmatprep.subr.mxu0 0.0
    %283 = vmatpush1.msra.mxu0 0.0
    %284 = vmatprep.subr.mxu0 0.0
    %285 = vmatpush1.msra.mxu0 0.0
    %286 = vmatprep.subr.mxu0 0.0
    %287 = vmatpush1.msra.mxu0 0.0
    %288 = vmatprep.subr.mxu0 0.0
    %289 = vmatpush1.msra.mxu0 0.0
    %290 = vmatprep.mubr.f32.mxu0 0.0
    %291 = vmatmul.mubr.f32.gmra.mrb[0].mxu0 %v201
    %v292 = vpop.f32.mrb[0].mxu0
    %v293 = vadd.f32 %v224, %v292
    %v294 = vpop.f32.mrb[0].mxu0
    %295 = vmatprep.mubr.f32.mxu0 0.0
    %296 = vmatmul.mubr.f32.gmra.mrb[0].mxu0 %v202
    %v297 = vpop.f32.mrb[0].mxu0
    %v298 = vadd.f32 %v224, %v297
    %v299 = vpop.f32.mrb[0].mxu0
    %300 = vdwg.mxu0
    %301 = vst [vmem:[#allocation11] sm:$0xff] %v293
    %302 = vst [vmem:[#allocation11 + $0x8] sm:$0xff] %v298
    // Predicated region
    $region42: #{_ffn_forward.1} parent=1 // pred_check
      _
    $region43: #{_ffn_forward.1} parent=1 // pred_check_branch
      %304 = sbr.rel (0) target = $region45
    $region44: #{_ffn_forward.1} parent=1 // pred_region
      %s306 = ssub.s32 256, 256
      %307 = vsyncadd [#allocation4], %s306
      %s308 = sshll.u32 [#allocation11], 4
      %s309 = int_to_ptr.vmem [resolvable:$true] %s308
      %314 = dma.vmem_to_hbm [thread:$0]  %s309, 256, %s5, [#allocation4], 128, 128, 8
    $region45: #{_ffn_forward.1} parent=1 // pred_fallthru
      _
    // Predicated region
    $region46: #{_ffn_forward.1} parent=1 // pred_check
      _
    $region47: #{_ffn_forward.1} parent=1 // pred_check_branch
      %316 = sbr.rel (0) target = $region49
    $region48: #{_ffn_forward.1} parent=1 // pred_region
      %317 = dma.done [#allocation4], 256
    $region49: #{_ffn_forward.1} parent=1 // pred_fallthru
      _
    %318 = vsyncpa [#allocation3], 1
    %319 = vsyncpa [#allocation6], 1
    %320 = vsyncpa [#allocation9], 1
    %321 = vsyncpa [#allocation4], 1

</llo_original>
